<compile_context>
chip_gen: v7x
topology: tpu7x:2x2x1
jax: 0.10.0
libtpu: 0.0.40
codegen_flags: <defaults>
</compile_context>

<pallas_src>
import functools

import jax
import jax.numpy as jnp
from jax.experimental import pallas as pl
from jax.experimental.pallas import tpu as pltpu


_LANE = 128
_MAX_ROW_TILE = 8192                     # big steps amortize ~0.35 us/step overhead
_TARGET_ROWS = 512                       # ~85% of HBM roofline at 512+ row tiles
_RELAYOUT_SLAB_BYTES = 4 * 1024 * 1024   # bound on the in-kernel reshape scratch


def _cdiv(a, b):
    return -(-a // b)


def _round_up(a, b):
    return _cdiv(a, b) * b


def _round_down(a, b):
    return (a // b) * b


def _sublane_pack(dtype):
    # sublane packing: f32 -> 8 rows/vreg-tile, bf16 -> 16, int8/fp8 -> 32
    itemsize = jnp.dtype(dtype).itemsize
    return max(8, 32 // max(1, itemsize))


@functools.lru_cache(maxsize=None)
def _generation_params():
    """Returns (accounted_vmem_budget, vmem_limit_bytes, multi_tensorcore)."""
    kind = ""
    try:
        kind = jax.devices()[0].device_kind.lower()
    except Exception:
        kind = ""
    if "v7" in kind:
        # v7x: 64 MiB VMEM per TensorCore, 2 TensorCores per chip.
        return 24 * 1024 * 1024, 40 * 1024 * 1024, True
    if any(g in kind for g in ("v4", "v5", "v6")):
        # 128 MiB physical VMEM; v5e/v6e are single-TensorCore.
        return 48 * 1024 * 1024, 96 * 1024 * 1024, False
    # Unknown hardware: keep the previously validated conservative settings.
    return 16 * 1024 * 1024, 32 * 1024 * 1024, True


def _step_bytes(rows_t, h_t, pool_size, itemsize):
    # Accounted VMEM per grid step: double-buffered input + output blocks plus
    # the bounded relayout slab the in-kernel reshape goes through.
    in_b = rows_t * h_t * itemsize
    out_b = rows_t * (h_t // pool_size) * itemsize
    return 2 * (in_b + out_b) + min(in_b, _RELAYOUT_SLAB_BYTES)


def _fold_factor(rows, out_hidden):
    """Fold k rows into one so the output last dim (k*out_hidden) is lane-dense.

    Exact: since hidden % pool_size == 0, pool groups never cross original-row
    boundaries, so MaxOut on [rows, hidden] equals MaxOut on [rows//k, k*hidden]
    for any divisor k of rows.
    """
    if out_hidden % _LANE == 0 or rows <= 1:
        return 1
    limit = min(rows, 1024)
    for k in range(2, limit + 1):
        if rows % k == 0 and (k * out_hidden) % _LANE == 0:
            return k
    if out_hidden >= _LANE:
        return 1  # already reasonably lane-dense; keep the row count
    best = 1
    for k in range(2, limit + 1):
        if rows % k == 0 and k * out_hidden <= 8 * _LANE:
            best = k
    return best


def _choose_col_tile(H, pool_size, itemsize, budget, pack):
    target_rows = max(_TARGET_ROWS, pack)
    if _step_bytes(target_rows, H, pool_size, itemsize) <= budget:
        return H  # full width fits alongside a healthy (>=512-row) tile
    unit = _LANE * pool_size  # keeps pool groups whole, both blocks lane-aligned
    if H % unit != 0:
        return H  # unaligned width; the wrapper has already padded if needed
    per_unit = 2 * target_rows * (unit + unit // pool_size) * itemsize
    m = max(1, (budget - _RELAYOUT_SLAB_BYTES) // per_unit)
    m = min(m, H // unit)
    while m > 1 and _step_bytes(target_rows, m * unit, pool_size, itemsize) > budget:
        m -= 1
    return int(m * unit)


def _choose_row_tile(R, tile_h, pool_size, itemsize, budget, pack, multi_tc):
    per_row = 2 * (tile_h + tile_h // pool_size) * itemsize
    avail = max(per_row, budget - _RELAYOUT_SLAB_BYTES)
    t = max(pack, _round_down(avail // per_row, pack))
    t = min(t, _MAX_ROW_TILE)
    if multi_tc and R >= 2 * pack:
        # keep >= 2 row-grid steps so both v7x TensorCores get work
        t = min(t, _round_up(_cdiv(R, 2), pack))
    if t >= R:
        t = R
    return int(t)


def _maxout_kernel(x_ref, o_ref, *, pool_size):
    # Consecutive groups of `pool_size` lanes, reduced with max.
    #
    # The reshape that splits the lane dim lowers to a relayout through VMEM
    # scratch; processing the tile in fixed row slabs bounds that scratch to
    # ~_RELAYOUT_SLAB_BYTES no matter how large the streamed tile is.
    # TODO(synk): rewrite as an unrolled jnp.maximum over pool_size
    # lane-strided reads (x_ref[:, pl.ds(p, oh, stride=pool_size)]) once Mosaic
    # supports non-unit strides on the minormost (lane) dim.
    r, h = x_ref.shape
    oh = h // pool_size
    itemsize = jnp.dtype(x_ref.dtype).itemsize
    row_bytes = max(1, h * itemsize)
    slab = max(1, _RELAYOUT_SLAB_BYTES // row_bytes)
    slab = max(8, (slab // 8) * 8)   # sublane-aligned slab boundaries
    slab = min(r, slab)
    for lo in range(0, r, slab):     # small static unroll (<= ~4 slabs)
        hi = min(r, lo + slab)
        xs = x_ref[lo:hi, :]
        o_ref[lo:hi, :] = jnp.max(xs.reshape(hi - lo, oh, pool_size), axis=-1)


def maxout(x, pool_size):
    """MaxOut over the last dimension, matching the PyTorch MaxOut module."""
    orig_shape = x.shape
    hidden = int(orig_shape[-1])
    if hidden % pool_size != 0:
        raise ValueError("last dim must be divisible by pool_size")
    out_hidden = hidden // pool_size

    rows = 1
    for d in orig_shape[:-1]:
        rows *= int(d)
    if rows == 0 or hidden == 0:
        return jnp.zeros((*orig_shape[:-1], out_hidden), x.dtype)

    itemsize = jnp.dtype(x.dtype).itemsize
    pack = _sublane_pack(x.dtype)
    budget, vmem_limit, multi_tc = _generation_params()

    # 1) Lane-dense output folding (free: pure reshape of contiguous rows).
    k = _fold_factor(rows, out_hidden)
    R, H = rows // k, hidden * k
    x2d = x.reshape(R, H)

    # 2) Very wide, non-(128*pool)-aligned hidden that would blow the budget
    #    even at a minimal row tile: pad up to the alignment unit so column
    #    tiling can bound VMEM (extra groups are sliced off the output).
    unit = _LANE * pool_size
    Hp = H
    if (k == 1 and H % unit != 0
            and _step_bytes(pack, H, pool_size, itemsize) > budget):
        Hp = _round_up(H, unit)
        x2d = jnp.pad(x2d, ((0, 0), (0, Hp - H)))
    OHp = Hp // pool_size

    # 3) Tile selection against the generation-aware VMEM budget.
    tile_h = _choose_col_tile(Hp, pool_size, itemsize, budget, pack)
    tile_r = _choose_row_tile(R, tile_h, pool_size, itemsize, budget, pack, multi_tc)
    # v7x: if neither axis would have >= 2 steps, split columns so the second
    # TensorCore is not left idle (lane-aligned halves).
    if (multi_tc and _cdiv(R, tile_r) == 1 and _cdiv(Hp, tile_h) == 1
            and Hp % unit == 0 and Hp >= 2 * unit):
        tile_h = _cdiv(Hp // unit, 2) * unit
    tile_oh = tile_h // pool_size

    grid = (_cdiv(R, tile_r), _cdiv(Hp, tile_h))

    out2d = pl.pallas_call(
        functools.partial(_maxout_kernel, pool_size=pool_size),
        out_shape=jax.ShapeDtypeStruct((R, OHp), x.dtype),
        grid_spec=pltpu.PrefetchScalarGridSpec(
            num_scalar_prefetch=0,
            grid=grid,
            in_specs=[pl.BlockSpec((tile_r, tile_h), lambda i, j: (i, j))],
            out_specs=pl.BlockSpec((tile_r, tile_oh), lambda i, j: (i, j)),
        ),
        compiler_params=pltpu.CompilerParams(
            dimension_semantics=("parallel", "parallel"),
            vmem_limit_bytes=vmem_limit,
        ),
        cost_estimate=pl.CostEstimate(
            flops=rows * hidden,
            transcendentals=0,
            bytes_accessed=(rows * hidden + rows * out_hidden) * itemsize,
        ),
    )(x2d)

    if Hp != H:
        out2d = out2d[:, : H // pool_size]
    return out2d.reshape(*orig_shape[:-1], out_hidden)


if __name__ == "__main__":
    key0, key1 = jax.random.split(jax.random.PRNGKey(0))

    # Small shape consistent with the module's typical (batch, seq, hidden) use.
    batch, seq, hidden = 2, 8, 32
    pool_size = 4
    x = jax.random.normal(key0, (batch, seq, hidden), dtype=jnp.float32)

    out = jax.block_until_ready(maxout(x, pool_size))
    ref = jnp.max(x.reshape(batch, seq, hidden // pool_size, pool_size), axis=-1)
    assert out.shape == (batch, seq, hidden // pool_size), out.shape
    assert jnp.allclose(out, ref), "mismatch vs reference (small shape)"

    # A second shape that exercises the lane-dense, budget-sized tiling path.
    b2, s2, h2, p2 = 8, 128, 512, 2
    x2 = jax.random.normal(key1, (b2, s2, h2), dtype=jnp.float32)
    out2 = jax.block_until_ready(maxout(x2, p2))
    ref2 = jnp.max(x2.reshape(b2, s2, h2 // p2, p2), axis=-1)
    assert out2.shape == (b2, s2, h2 // p2), out2.shape
    assert jnp.allclose(out2, ref2), "mismatch vs reference (tiled shape)"

    print("KERNEL_OK")
</pallas_src>

<mosaic_0001>
module attributes {stable_mosaic.version = 11 : i64} {
  func.func @_maxout_kernel(%arg0: i32, %arg1: i32, %arg2: memref<1x512xf32, #tpu.memory_space<vmem>>, %arg3: memref<1x128xf32, #tpu.memory_space<vmem>>) attributes {dimension_semantics = [#tpu.dimension_semantics<parallel>, #tpu.dimension_semantics<parallel>], iteration_bounds = array<i64: 1, 1>, scalar_prefetch = 0 : i64, scratch_operands = 0 : i64, tpu.core_type = #tpu.core_type<tc>, window_params = [{transform_indices = @transform_0, window_bounds = array<i64: 1, 512>}, {transform_indices = @transform_1, window_bounds = array<i64: 1, 128>}]} {
    %c0 = arith.constant 0 : index
    %c0_0 = arith.constant 0 : index
    %0 = vector.load %arg2[%c0, %c0_0] : memref<1x512xf32, #tpu.memory_space<vmem>>, vector<1x512xf32>
    %1 = vector.shape_cast %0 : vector<1x512xf32> to vector<1x128x4xf32>
    %cst = arith.constant dense<0xFF800000> : vector<1x128xf32>
    %2 = vector.multi_reduction <maximumf>, %1, %cst [2] : vector<1x128x4xf32> to vector<1x128xf32>
    %c0_1 = arith.constant 0 : index
    %c0_2 = arith.constant 0 : index
    %3 = vector.load %arg3[%c0_1, %c0_2] : memref<1x128xf32, #tpu.memory_space<vmem>>, vector<1x128xf32>
    tpu.vector_store %arg3[%c0_1, %c0_2], %2 {strides = array<i32>} : memref<1x128xf32, #tpu.memory_space<vmem>>, vector<1x128xf32>,
    return
  }
  func.func @transform_0(%arg0: i32, %arg1: i32) -> (i32, i32) {
    %c0_i32 = arith.constant 0 : i32
    return %arg0, %arg1 : i32, i32
  }
  func.func @transform_1(%arg0: i32, %arg1: i32) -> (i32, i32) {
    %c0_i32 = arith.constant 0 : i32
    return %arg0, %arg1 : i32, i32
  }
}

</mosaic_0001>

<llo_original>
// kernel: tpu_custom_call.1
$region0: #{tpu_custom_call.1}
  #allocation0 [shape = 'u32[]', space=smem, size = 0x4, offset = 0x4, fixed_abs, tag = 'smem constant byte address 0x4 - core index']
  #allocation1 [shape = 'u32[144,128]{1,0:T(1,128)}', space=vmem, size = 0x12000, scoped, tag = 'internal scratch']
  %s0 = inlined_call_operand.hbm [shape: f32[1,512], index: 0, kind: input, shape index: {}]
  %s1 = inlined_call_operand.hbm [shape: f32[1,128], index: 1, kind: output, shape index: {}]
  %s2 = sld [smem:[#allocation0]]
  $region18: #{tpu_custom_call.1} parent=0
    _
  %s4 = ssub.s32 1, %s2
  %s5 = scalar_select 0, %s4, %s2
  $region1: #{tpu_custom_call.1} parent=0
    #allocation2 [shape = 'u8[2048]{0}', space=vmem, size = 0x800, scoped, tag = 'input window, operand 0, single buffered']
    #allocation3 [shape = 's32[1]{0}', space=sflag, size = 0x4, scoped, tag = 'scoped memory for tpu_custom_call.1']
    #allocation4 [shape = 's32[1]{0}', space=sflag, size = 0x4, scoped, tag = 'scoped memory for tpu_custom_call.1']
    #allocation5 [shape = 'u8[512]{0}', space=vmem, size = 0x400, scoped, tag = 'output window, operand 0, single buffered']
    %6 = vsyncpa [#allocation3], 0
    %7 = vsyncpa [#allocation4], 0
    // Predicated region
    $region2: #{tpu_custom_call.1} parent=1 // pred_check
      _
    $region3: #{tpu_custom_call.1} parent=1 // pred_check_branch
      %9 = sbr.rel (0) target = $region5
    $region4: #{tpu_custom_call.1} parent=1 // pred_region
      %s11 = ssub.s32 64, 64
      %12 = vsyncadd [#allocation3], %s11
      %s14 = sshll.u32 [#allocation2], 4
      %s15 = int_to_ptr.vmem [resolvable:$true] %s14
      %17 = dma.hbm_to_vmem [thread:$0]  %s0, 64, %s15, [#allocation3]
    $region5: #{tpu_custom_call.1} parent=1 // pred_fallthru
      _
    // Predicated region
    $region6: #{tpu_custom_call.1} parent=1 // pred_check
      _
    $region7: #{tpu_custom_call.1} parent=1 // pred_check_branch
      %19 = sbr.rel (0) target = $region9
    $region8: #{tpu_custom_call.1} parent=1 // pred_region
      %20 = dma.done [#allocation3], 64
    $region9: #{tpu_custom_call.1} parent=1 // pred_fallthru
      _
    %v21 = vld [vmem:[#allocation2] sm:$0xf]
    %v23 = vrot.slane %v21, 1
    %24 = vrot.lane.b32.xlu0 %v21, 124
    %v25 = vpop.permute.xlu0 %24
    %v26 = vrot.slane %v25, 1
    %27 = vrot.lane.b32.xlu0 %v21, 120
    %v28 = vpop.permute.xlu0 %27
    %v29 = vrot.slane %v28, 1
    %30 = vrot.lane.b32.xlu0 %v21, 116
    %v31 = vpop.permute.xlu0 %30
    %v32 = vrot.slane %v31, 1
    %33 = vrot.lane.b32.xlu0 %v21, 112
    %v34 = vpop.permute.xlu0 %33
    %v35 = vrot.slane %v34, 1
    %36 = vrot.lane.b32.xlu0 %v21, 108
    %v37 = vpop.permute.xlu0 %36
    %v38 = vrot.slane %v37, 1
    %39 = vrot.lane.b32.xlu0 %v21, 104
    %v40 = vpop.permute.xlu0 %39
    %v41 = vrot.slane %v40, 1
    %42 = vrot.lane.b32.xlu0 %v21, 100
    %v43 = vpop.permute.xlu0 %42
    %v44 = vrot.slane %v43, 1
    %45 = vrot.lane.b32.xlu0 %v21, 96
    %v46 = vpop.permute.xlu0 %45
    %v47 = vrot.slane %v46, 1
    %48 = vrot.lane.b32.xlu0 %v21, 92
    %v49 = vpop.permute.xlu0 %48
    %v50 = vrot.slane %v49, 1
    %51 = vrot.lane.b32.xlu0 %v21, 88
    %v52 = vpop.permute.xlu0 %51
    %v53 = vrot.slane %v52, 1
    %54 = vrot.lane.b32.xlu0 %v21, 84
    %v55 = vpop.permute.xlu0 %54
    %v56 = vrot.slane %v55, 1
    %57 = vrot.lane.b32.xlu0 %v21, 80
    %v58 = vpop.permute.xlu0 %57
    %v59 = vrot.slane %v58, 1
    %60 = vrot.lane.b32.xlu0 %v21, 76
    %v61 = vpop.permute.xlu0 %60
    %v62 = vrot.slane %v61, 1
    %63 = vrot.lane.b32.xlu0 %v21, 72
    %v64 = vpop.permute.xlu0 %63
    %v65 = vrot.slane %v64, 1
    %66 = vrot.lane.b32.xlu0 %v21, 68
    %v67 = vpop.permute.xlu0 %66
    %v68 = vrot.slane %v67, 1
    %69 = vrot.lane.b32.xlu0 %v21, 64
    %v70 = vpop.permute.xlu0 %69
    %v71 = vrot.slane %v70, 1
    %72 = vrot.lane.b32.xlu0 %v21, 60
    %v73 = vpop.permute.xlu0 %72
    %v74 = vrot.slane %v73, 1
    %75 = vrot.lane.b32.xlu0 %v21, 56
    %v76 = vpop.permute.xlu0 %75
    %v77 = vrot.slane %v76, 1
    %78 = vrot.lane.b32.xlu0 %v21, 52
    %v79 = vpop.permute.xlu0 %78
    %v80 = vrot.slane %v79, 1
    %81 = vrot.lane.b32.xlu0 %v21, 48
    %v82 = vpop.permute.xlu0 %81
    %v83 = vrot.slane %v82, 1
    %84 = vrot.lane.b32.xlu0 %v21, 44
    %v85 = vpop.permute.xlu0 %84
    %v86 = vrot.slane %v85, 1
    %87 = vrot.lane.b32.xlu0 %v21, 40
    %v88 = vpop.permute.xlu0 %87
    %v89 = vrot.slane %v88, 1
    %90 = vrot.lane.b32.xlu0 %v21, 36
    %v91 = vpop.permute.xlu0 %90
    %v92 = vrot.slane %v91, 1
    %93 = vrot.lane.b32.xlu0 %v21, 32
    %v94 = vpop.permute.xlu0 %93
    %v95 = vrot.slane %v94, 1
    %96 = vrot.lane.b32.xlu0 %v21, 28
    %v97 = vpop.permute.xlu0 %96
    %v98 = vrot.slane %v97, 1
    %99 = vrot.lane.b32.xlu0 %v21, 24
    %v100 = vpop.permute.xlu0 %99
    %v101 = vrot.slane %v100, 1
    %102 = vrot.lane.b32.xlu0 %v21, 20
    %v103 = vpop.permute.xlu0 %102
    %v104 = vrot.slane %v103, 1
    %105 = vrot.lane.b32.xlu0 %v21, 16
    %v106 = vpop.permute.xlu0 %105
    %v107 = vrot.slane %v106, 1
    %108 = vrot.lane.b32.xlu0 %v21, 12
    %v109 = vpop.permute.xlu0 %108
    %v110 = vrot.slane %v109, 1
    %111 = vrot.lane.b32.xlu0 %v21, 8
    %v112 = vpop.permute.xlu0 %111
    %v113 = vrot.slane %v112, 1
    %114 = vrot.lane.b32.xlu0 %v21, 4
    %v115 = vpop.permute.xlu0 %114
    %v116 = vrot.slane %v115, 1
    %v117 = vrot.slane %v21, 2
    %v118 = vrot.slane %v25, 2
    %v119 = vrot.slane %v28, 2
    %v120 = vrot.slane %v31, 2
    %v121 = vrot.slane %v34, 2
    %v122 = vrot.slane %v37, 2
    %v123 = vrot.slane %v40, 2
    %v124 = vrot.slane %v43, 2
    %v125 = vrot.slane %v46, 2
    %v126 = vrot.slane %v49, 2
    %v127 = vrot.slane %v52, 2
    %v128 = vrot.slane %v55, 2
    %v129 = vrot.slane %v58, 2
    %v130 = vrot.slane %v61, 2
    %v131 = vrot.slane %v64, 2
    %v132 = vrot.slane %v67, 2
    %v133 = vrot.slane %v70, 2
    %v134 = vrot.slane %v73, 2
    %v135 = vrot.slane %v76, 2
    %v136 = vrot.slane %v79, 2
    %v137 = vrot.slane %v82, 2
    %v138 = vrot.slane %v85, 2
    %v139 = vrot.slane %v88, 2
    %v140 = vrot.slane %v91, 2
    %v141 = vrot.slane %v94, 2
    %v142 = vrot.slane %v97, 2
    %v143 = vrot.slane %v100, 2
    %v144 = vrot.slane %v103, 2
    %v145 = vrot.slane %v106, 2
    %v146 = vrot.slane %v109, 2
    %v147 = vrot.slane %v112, 2
    %v148 = vrot.slane %v115, 2
    %v149 = vrot.slane %v21, 3
    %v150 = vrot.slane %v25, 3
    %v151 = vrot.slane %v28, 3
    %v152 = vrot.slane %v31, 3
    %v153 = vrot.slane %v34, 3
    %v154 = vrot.slane %v37, 3
    %v155 = vrot.slane %v40, 3
    %v156 = vrot.slane %v43, 3
    %v157 = vrot.slane %v46, 3
    %v158 = vrot.slane %v49, 3
    %v159 = vrot.slane %v52, 3
    %v160 = vrot.slane %v55, 3
    %v161 = vrot.slane %v58, 3
    %v162 = vrot.slane %v61, 3
    %v163 = vrot.slane %v64, 3
    %v164 = vrot.slane %v67, 3
    %v165 = vrot.slane %v70, 3
    %v166 = vrot.slane %v73, 3
    %v167 = vrot.slane %v76, 3
    %v168 = vrot.slane %v79, 3
    %v169 = vrot.slane %v82, 3
    %v170 = vrot.slane %v85, 3
    %v171 = vrot.slane %v88, 3
    %v172 = vrot.slane %v91, 3
    %v173 = vrot.slane %v94, 3
    %v174 = vrot.slane %v97, 3
    %v175 = vrot.slane %v100, 3
    %v176 = vrot.slane %v103, 3
    %v177 = vrot.slane %v106, 3
    %v178 = vrot.slane %v109, 3
    %v179 = vrot.slane %v112, 3
    %v180 = vrot.slane %v115, 3
    %v181 = vcombine.low %v21, %v25
    %v182 = vcombine.low %v28, %v31
    %v183 = vcombine.low %v34, %v37
    %v184 = vcombine.low %v40, %v43
    %v186 = vunpack.c.l.s4 1966171168
    %v187 = vunpack.c.0.s8 %v186
    %v188 = vlaneseq
    %v189 = vshrl.u32 %v188, 7
    %v190 = vsub.s32 %v187, %v189
    %v191 = vrot.slane %v181, %v190
    %v193 = vunpack.c.l.s4 1966171168
    %v194 = vunpack.c.0.s8 %v193
    %v195 = vlaneseq
    %v196 = vshrl.u32 %v195, 7
    %v197 = vsub.s32 %v194, %v196
    %v198 = vrot.slane %v182, %v197
    %v200 = vunpack.c.l.s4 1966171168
    %v201 = vunpack.c.0.s8 %v200
    %v202 = vlaneseq
    %v203 = vshrl.u32 %v202, 7
    %v204 = vsub.s32 %v201, %v203
    %v205 = vrot.slane %v183, %v204
    %v207 = vunpack.c.l.s4 1966171168
    %v208 = vunpack.c.0.s8 %v207
    %v209 = vlaneseq
    %v210 = vshrl.u32 %v209, 7
    %v211 = vsub.s32 %v208, %v210
    %v212 = vrot.slane %v184, %v211
    %v213 = vcombine.low %v191, %v198
    %v214 = vcombine.low %v205, %v212
    %v216 = vunpack.c.l.s4 1966171168
    %v217 = vunpack.c.0.s8 %v216
    %v218 = vlaneseq
    %v219 = vshrl.u32 %v218, 7
    %v220 = vsub.s32 %v217, %v219
    %v221 = vrot.slane %v213, %v220
    %v223 = vunpack.c.l.s4 1966171168
    %v224 = vunpack.c.0.s8 %v223
    %v225 = vlaneseq
    %v226 = vshrl.u32 %v225, 7
    %v227 = vsub.s32 %v224, %v226
    %v228 = vrot.slane %v214, %v227
    %v229 = vcombine.low %v221, %v228
    %v230 = vcombine.low %v46, %v49
    %v231 = vcombine.low %v52, %v55
    %v232 = vcombine.low %v58, %v61
    %v233 = vcombine.low %v64, %v67
    %v235 = vunpack.c.l.s4 1966171168
    %v236 = vunpack.c.0.s8 %v235
    %v237 = vlaneseq
    %v238 = vshrl.u32 %v237, 7
    %v239 = vsub.s32 %v236, %v238
    %v240 = vrot.slane %v230, %v239
    %v242 = vunpack.c.l.s4 1966171168
    %v243 = vunpack.c.0.s8 %v242
    %v244 = vlaneseq
    %v245 = vshrl.u32 %v244, 7
    %v246 = vsub.s32 %v243, %v245
    %v247 = vrot.slane %v231, %v246
    %v249 = vunpack.c.l.s4 1966171168
    %v250 = vunpack.c.0.s8 %v249
    %v251 = vlaneseq
    %v252 = vshrl.u32 %v251, 7
    %v253 = vsub.s32 %v250, %v252
    %v254 = vrot.slane %v232, %v253
    %v256 = vunpack.c.l.s4 1966171168
    %v257 = vunpack.c.0.s8 %v256
    %v258 = vlaneseq
    %v259 = vshrl.u32 %v258, 7
    %v260 = vsub.s32 %v257, %v259
    %v261 = vrot.slane %v233, %v260
    %v262 = vcombine.low %v240, %v247
    %v263 = vcombine.low %v254, %v261
    %v265 = vunpack.c.l.s4 1966171168
    %v266 = vunpack.c.0.s8 %v265
    %v267 = vlaneseq
    %v268 = vshrl.u32 %v267, 7
    %v269 = vsub.s32 %v266, %v268
    %v270 = vrot.slane %v262, %v269
    %v272 = vunpack.c.l.s4 1966171168
    %v273 = vunpack.c.0.s8 %v272
    %v274 = vlaneseq
    %v275 = vshrl.u32 %v274, 7
    %v276 = vsub.s32 %v273, %v275
    %v277 = vrot.slane %v263, %v276
    %v278 = vcombine.low %v270, %v277
    %v279 = vcombine.low %v70, %v73
    %v280 = vcombine.low %v76, %v79
    %v281 = vcombine.low %v82, %v85
    %v282 = vcombine.low %v88, %v91
    %v284 = vunpack.c.l.s4 1966171168
    %v285 = vunpack.c.0.s8 %v284
    %v286 = vlaneseq
    %v287 = vshrl.u32 %v286, 7
    %v288 = vsub.s32 %v285, %v287
    %v289 = vrot.slane %v279, %v288
    %v291 = vunpack.c.l.s4 1966171168
    %v292 = vunpack.c.0.s8 %v291
    %v293 = vlaneseq
    %v294 = vshrl.u32 %v293, 7
    %v295 = vsub.s32 %v292, %v294
    %v296 = vrot.slane %v280, %v295
    %v298 = vunpack.c.l.s4 1966171168
    %v299 = vunpack.c.0.s8 %v298
    %v300 = vlaneseq
    %v301 = vshrl.u32 %v300, 7
    %v302 = vsub.s32 %v299, %v301
    %v303 = vrot.slane %v281, %v302
    %v305 = vunpack.c.l.s4 1966171168
    %v306 = vunpack.c.0.s8 %v305
    %v307 = vlaneseq
    %v308 = vshrl.u32 %v307, 7
    %v309 = vsub.s32 %v306, %v308
    %v310 = vrot.slane %v282, %v309
    %v311 = vcombine.low %v289, %v296
    %v312 = vcombine.low %v303, %v310
    %v314 = vunpack.c.l.s4 1966171168
    %v315 = vunpack.c.0.s8 %v314
    %v316 = vlaneseq
    %v317 = vshrl.u32 %v316, 7
    %v318 = vsub.s32 %v315, %v317
    %v319 = vrot.slane %v311, %v318
    %v321 = vunpack.c.l.s4 1966171168
    %v322 = vunpack.c.0.s8 %v321
    %v323 = vlaneseq
    %v324 = vshrl.u32 %v323, 7
    %v325 = vsub.s32 %v322, %v324
    %v326 = vrot.slane %v312, %v325
    %v327 = vcombine.low %v319, %v326
    %v328 = vcombine.low %v94, %v97
    %v329 = vcombine.low %v100, %v103
    %v330 = vcombine.low %v106, %v109
    %v331 = vcombine.low %v112, %v115
    %v333 = vunpack.c.l.s4 1966171168
    %v334 = vunpack.c.0.s8 %v333
    %v335 = vlaneseq
    %v336 = vshrl.u32 %v335, 7
    %v337 = vsub.s32 %v334, %v336
    %v338 = vrot.slane %v328, %v337
    %v340 = vunpack.c.l.s4 1966171168
    %v341 = vunpack.c.0.s8 %v340
    %v342 = vlaneseq
    %v343 = vshrl.u32 %v342, 7
    %v344 = vsub.s32 %v341, %v343
    %v345 = vrot.slane %v329, %v344
    %v347 = vunpack.c.l.s4 1966171168
    %v348 = vunpack.c.0.s8 %v347
    %v349 = vlaneseq
    %v350 = vshrl.u32 %v349, 7
    %v351 = vsub.s32 %v348, %v350
    %v352 = vrot.slane %v330, %v351
    %v354 = vunpack.c.l.s4 1966171168
    %v355 = vunpack.c.0.s8 %v354
    %v356 = vlaneseq
    %v357 = vshrl.u32 %v356, 7
    %v358 = vsub.s32 %v355, %v357
    %v359 = vrot.slane %v331, %v358
    %v360 = vcombine.low %v338, %v345
    %v361 = vcombine.low %v352, %v359
    %v363 = vunpack.c.l.s4 1966171168
    %v364 = vunpack.c.0.s8 %v363
    %v365 = vlaneseq
    %v366 = vshrl.u32 %v365, 7
    %v367 = vsub.s32 %v364, %v366
    %v368 = vrot.slane %v360, %v367
    %v370 = vunpack.c.l.s4 1966171168
    %v371 = vunpack.c.0.s8 %v370
    %v372 = vlaneseq
    %v373 = vshrl.u32 %v372, 7
    %v374 = vsub.s32 %v371, %v373
    %v375 = vrot.slane %v361, %v374
    %v376 = vcombine.low %v368, %v375
    %v377 = vcombine.low %v23, %v26
    %v378 = vcombine.low %v29, %v32
    %v379 = vcombine.low %v35, %v38
    %v380 = vcombine.low %v41, %v44
    %v382 = vunpack.c.l.s4 1966171168
    %v383 = vunpack.c.0.s8 %v382
    %v384 = vlaneseq
    %v385 = vshrl.u32 %v384, 7
    %v386 = vsub.s32 %v383, %v385
    %v387 = vrot.slane %v377, %v386
    %v389 = vunpack.c.l.s4 1966171168
    %v390 = vunpack.c.0.s8 %v389
    %v391 = vlaneseq
    %v392 = vshrl.u32 %v391, 7
    %v393 = vsub.s32 %v390, %v392
    %v394 = vrot.slane %v378, %v393
    %v396 = vunpack.c.l.s4 1966171168
    %v397 = vunpack.c.0.s8 %v396
    %v398 = vlaneseq
    %v399 = vshrl.u32 %v398, 7
    %v400 = vsub.s32 %v397, %v399
    %v401 = vrot.slane %v379, %v400
    %v403 = vunpack.c.l.s4 1966171168
    %v404 = vunpack.c.0.s8 %v403
    %v405 = vlaneseq
    %v406 = vshrl.u32 %v405, 7
    %v407 = vsub.s32 %v404, %v406
    %v408 = vrot.slane %v380, %v407
    %v409 = vcombine.low %v387, %v394
    %v410 = vcombine.low %v401, %v408
    %v412 = vunpack.c.l.s4 1966171168
    %v413 = vunpack.c.0.s8 %v412
    %v414 = vlaneseq
    %v415 = vshrl.u32 %v414, 7
    %v416 = vsub.s32 %v413, %v415
    %v417 = vrot.slane %v409, %v416
    %v419 = vunpack.c.l.s4 1966171168
    %v420 = vunpack.c.0.s8 %v419
    %v421 = vlaneseq
    %v422 = vshrl.u32 %v421, 7
    %v423 = vsub.s32 %v420, %v422
    %v424 = vrot.slane %v410, %v423
    %v425 = vcombine.low %v417, %v424
    %v426 = vcombine.low %v47, %v50
    %v427 = vcombine.low %v53, %v56
    %v428 = vcombine.low %v59, %v62
    %v429 = vcombine.low %v65, %v68
    %v431 = vunpack.c.l.s4 1966171168
    %v432 = vunpack.c.0.s8 %v431
    %v433 = vlaneseq
    %v434 = vshrl.u32 %v433, 7
    %v435 = vsub.s32 %v432, %v434
    %v436 = vrot.slane %v426, %v435
    %v438 = vunpack.c.l.s4 1966171168
    %v439 = vunpack.c.0.s8 %v438
    %v440 = vlaneseq
    %v441 = vshrl.u32 %v440, 7
    %v442 = vsub.s32 %v439, %v441
    %v443 = vrot.slane %v427, %v442
    %v445 = vunpack.c.l.s4 1966171168
    %v446 = vunpack.c.0.s8 %v445
    %v447 = vlaneseq
    %v448 = vshrl.u32 %v447, 7
    %v449 = vsub.s32 %v446, %v448
    %v450 = vrot.slane %v428, %v449
    %v452 = vunpack.c.l.s4 1966171168
    %v453 = vunpack.c.0.s8 %v452
    %v454 = vlaneseq
    %v455 = vshrl.u32 %v454, 7
    %v456 = vsub.s32 %v453, %v455
    %v457 = vrot.slane %v429, %v456
    %v458 = vcombine.low %v436, %v443
    %v459 = vcombine.low %v450, %v457
    %v461 = vunpack.c.l.s4 1966171168
    %v462 = vunpack.c.0.s8 %v461
    %v463 = vlaneseq
    %v464 = vshrl.u32 %v463, 7
    %v465 = vsub.s32 %v462, %v464
    %v466 = vrot.slane %v458, %v465
    %v468 = vunpack.c.l.s4 1966171168
    %v469 = vunpack.c.0.s8 %v468
    %v470 = vlaneseq
    %v471 = vshrl.u32 %v470, 7
    %v472 = vsub.s32 %v469, %v471
    %v473 = vrot.slane %v459, %v472
    %v474 = vcombine.low %v466, %v473
    %v475 = vcombine.low %v71, %v74
    %v476 = vcombine.low %v77, %v80
    %v477 = vcombine.low %v83, %v86
    %v478 = vcombine.low %v89, %v92
    %v480 = vunpack.c.l.s4 1966171168
    %v481 = vunpack.c.0.s8 %v480
    %v482 = vlaneseq
    %v483 = vshrl.u32 %v482, 7
    %v484 = vsub.s32 %v481, %v483
    %v485 = vrot.slane %v475, %v484
    %v487 = vunpack.c.l.s4 1966171168
    %v488 = vunpack.c.0.s8 %v487
    %v489 = vlaneseq
    %v490 = vshrl.u32 %v489, 7
    %v491 = vsub.s32 %v488, %v490
    %v492 = vrot.slane %v476, %v491
    %v494 = vunpack.c.l.s4 1966171168
    %v495 = vunpack.c.0.s8 %v494
    %v496 = vlaneseq
    %v497 = vshrl.u32 %v496, 7
    %v498 = vsub.s32 %v495, %v497
    %v499 = vrot.slane %v477, %v498
    %v501 = vunpack.c.l.s4 1966171168
    %v502 = vunpack.c.0.s8 %v501
    %v503 = vlaneseq
    %v504 = vshrl.u32 %v503, 7
    %v505 = vsub.s32 %v502, %v504
    %v506 = vrot.slane %v478, %v505
    %v507 = vcombine.low %v485, %v492
    %v508 = vcombine.low %v499, %v506
    %v510 = vunpack.c.l.s4 1966171168
    %v511 = vunpack.c.0.s8 %v510
    %v512 = vlaneseq
    %v513 = vshrl.u32 %v512, 7
    %v514 = vsub.s32 %v511, %v513
    %v515 = vrot.slane %v507, %v514
    %v517 = vunpack.c.l.s4 1966171168
    %v518 = vunpack.c.0.s8 %v517
    %v519 = vlaneseq
    %v520 = vshrl.u32 %v519, 7
    %v521 = vsub.s32 %v518, %v520
    %v522 = vrot.slane %v508, %v521
    %v523 = vcombine.low %v515, %v522
    %v524 = vcombine.low %v95, %v98
    %v525 = vcombine.low %v101, %v104
    %v526 = vcombine.low %v107, %v110
    %v527 = vcombine.low %v113, %v116
    %v529 = vunpack.c.l.s4 1966171168
    %v530 = vunpack.c.0.s8 %v529
    %v531 = vlaneseq
    %v532 = vshrl.u32 %v531, 7
    %v533 = vsub.s32 %v530, %v532
    %v534 = vrot.slane %v524, %v533
    %v536 = vunpack.c.l.s4 1966171168
    %v537 = vunpack.c.0.s8 %v536
    %v538 = vlaneseq
    %v539 = vshrl.u32 %v538, 7
    %v540 = vsub.s32 %v537, %v539
    %v541 = vrot.slane %v525, %v540
    %v543 = vunpack.c.l.s4 1966171168
    %v544 = vunpack.c.0.s8 %v543
    %v545 = vlaneseq
    %v546 = vshrl.u32 %v545, 7
    %v547 = vsub.s32 %v544, %v546
    %v548 = vrot.slane %v526, %v547
    %v550 = vunpack.c.l.s4 1966171168
    %v551 = vunpack.c.0.s8 %v550
    %v552 = vlaneseq
    %v553 = vshrl.u32 %v552, 7
    %v554 = vsub.s32 %v551, %v553
    %v555 = vrot.slane %v527, %v554
    %v556 = vcombine.low %v534, %v541
    %v557 = vcombine.low %v548, %v555
    %v559 = vunpack.c.l.s4 1966171168
    %v560 = vunpack.c.0.s8 %v559
    %v561 = vlaneseq
    %v562 = vshrl.u32 %v561, 7
    %v563 = vsub.s32 %v560, %v562
    %v564 = vrot.slane %v556, %v563
    %v566 = vunpack.c.l.s4 1966171168
    %v567 = vunpack.c.0.s8 %v566
    %v568 = vlaneseq
    %v569 = vshrl.u32 %v568, 7
    %v570 = vsub.s32 %v567, %v569
    %v571 = vrot.slane %v557, %v570
    %v572 = vcombine.low %v564, %v571
    %v573 = vcombine.low %v117, %v118
    %v574 = vcombine.low %v119, %v120
    %v575 = vcombine.low %v121, %v122
    %v576 = vcombine.low %v123, %v124
    %v578 = vunpack.c.l.s4 1966171168
    %v579 = vunpack.c.0.s8 %v578
    %v580 = vlaneseq
    %v581 = vshrl.u32 %v580, 7
    %v582 = vsub.s32 %v579, %v581
    %v583 = vrot.slane %v573, %v582
    %v585 = vunpack.c.l.s4 1966171168
    %v586 = vunpack.c.0.s8 %v585
    %v587 = vlaneseq
    %v588 = vshrl.u32 %v587, 7
    %v589 = vsub.s32 %v586, %v588
    %v590 = vrot.slane %v574, %v589
    %v592 = vunpack.c.l.s4 1966171168
    %v593 = vunpack.c.0.s8 %v592
    %v594 = vlaneseq
    %v595 = vshrl.u32 %v594, 7
    %v596 = vsub.s32 %v593, %v595
    %v597 = vrot.slane %v575, %v596
    %v599 = vunpack.c.l.s4 1966171168
    %v600 = vunpack.c.0.s8 %v599
    %v601 = vlaneseq
    %v602 = vshrl.u32 %v601, 7
    %v603 = vsub.s32 %v600, %v602
    %v604 = vrot.slane %v576, %v603
    %v605 = vcombine.low %v583, %v590
    %v606 = vcombine.low %v597, %v604
    %v608 = vunpack.c.l.s4 1966171168
    %v609 = vunpack.c.0.s8 %v608
    %v610 = vlaneseq
    %v611 = vshrl.u32 %v610, 7
    %v612 = vsub.s32 %v609, %v611
    %v613 = vrot.slane %v605, %v612
    %v615 = vunpack.c.l.s4 1966171168
    %v616 = vunpack.c.0.s8 %v615
    %v617 = vlaneseq
    %v618 = vshrl.u32 %v617, 7
    %v619 = vsub.s32 %v616, %v618
    %v620 = vrot.slane %v606, %v619
    %v621 = vcombine.low %v613, %v620
    %v622 = vcombine.low %v125, %v126
    %v623 = vcombine.low %v127, %v128
    %v624 = vcombine.low %v129, %v130
    %v625 = vcombine.low %v131, %v132
    %v627 = vunpack.c.l.s4 1966171168
    %v628 = vunpack.c.0.s8 %v627
    %v629 = vlaneseq
    %v630 = vshrl.u32 %v629, 7
    %v631 = vsub.s32 %v628, %v630
    %v632 = vrot.slane %v622, %v631
    %v634 = vunpack.c.l.s4 1966171168
    %v635 = vunpack.c.0.s8 %v634
    %v636 = vlaneseq
    %v637 = vshrl.u32 %v636, 7
    %v638 = vsub.s32 %v635, %v637
    %v639 = vrot.slane %v623, %v638
    %v641 = vunpack.c.l.s4 1966171168
    %v642 = vunpack.c.0.s8 %v641
    %v643 = vlaneseq
    %v644 = vshrl.u32 %v643, 7
    %v645 = vsub.s32 %v642, %v644
    %v646 = vrot.slane %v624, %v645
    %v648 = vunpack.c.l.s4 1966171168
    %v649 = vunpack.c.0.s8 %v648
    %v650 = vlaneseq
    %v651 = vshrl.u32 %v650, 7
    %v652 = vsub.s32 %v649, %v651
    %v653 = vrot.slane %v625, %v652
    %v654 = vcombine.low %v632, %v639
    %v655 = vcombine.low %v646, %v653
    %v657 = vunpack.c.l.s4 1966171168
    %v658 = vunpack.c.0.s8 %v657
    %v659 = vlaneseq
    %v660 = vshrl.u32 %v659, 7
    %v661 = vsub.s32 %v658, %v660
    %v662 = vrot.slane %v654, %v661
    %v664 = vunpack.c.l.s4 1966171168
    %v665 = vunpack.c.0.s8 %v664
    %v666 = vlaneseq
    %v667 = vshrl.u32 %v666, 7
    %v668 = vsub.s32 %v665, %v667
    %v669 = vrot.slane %v655, %v668
    %v670 = vcombine.low %v662, %v669
    %v671 = vcombine.low %v133, %v134
    %v672 = vcombine.low %v135, %v136
    %v673 = vcombine.low %v137, %v138
    %v674 = vcombine.low %v139, %v140
    %v676 = vunpack.c.l.s4 1966171168
    %v677 = vunpack.c.0.s8 %v676
    %v678 = vlaneseq
    %v679 = vshrl.u32 %v678, 7
    %v680 = vsub.s32 %v677, %v679
    %v681 = vrot.slane %v671, %v680
    %v683 = vunpack.c.l.s4 1966171168
    %v684 = vunpack.c.0.s8 %v683
    %v685 = vlaneseq
    %v686 = vshrl.u32 %v685, 7
    %v687 = vsub.s32 %v684, %v686
    %v688 = vrot.slane %v672, %v687
    %v690 = vunpack.c.l.s4 1966171168
    %v691 = vunpack.c.0.s8 %v690
    %v692 = vlaneseq
    %v693 = vshrl.u32 %v692, 7
    %v694 = vsub.s32 %v691, %v693
    %v695 = vrot.slane %v673, %v694
    %v697 = vunpack.c.l.s4 1966171168
    %v698 = vunpack.c.0.s8 %v697
    %v699 = vlaneseq
    %v700 = vshrl.u32 %v699, 7
    %v701 = vsub.s32 %v698, %v700
    %v702 = vrot.slane %v674, %v701
    %v703 = vcombine.low %v681, %v688
    %v704 = vcombine.low %v695, %v702
    %v706 = vunpack.c.l.s4 1966171168
    %v707 = vunpack.c.0.s8 %v706
    %v708 = vlaneseq
    %v709 = vshrl.u32 %v708, 7
    %v710 = vsub.s32 %v707, %v709
    %v711 = vrot.slane %v703, %v710
    %v713 = vunpack.c.l.s4 1966171168
    %v714 = vunpack.c.0.s8 %v713
    %v715 = vlaneseq
    %v716 = vshrl.u32 %v715, 7
    %v717 = vsub.s32 %v714, %v716
    %v718 = vrot.slane %v704, %v717
    %v719 = vcombine.low %v711, %v718
    %v720 = vcombine.low %v141, %v142
    %v721 = vcombine.low %v143, %v144
    %v722 = vcombine.low %v145, %v146
    %v723 = vcombine.low %v147, %v148
    %v725 = vunpack.c.l.s4 1966171168
    %v726 = vunpack.c.0.s8 %v725
    %v727 = vlaneseq
    %v728 = vshrl.u32 %v727, 7
    %v729 = vsub.s32 %v726, %v728
    %v730 = vrot.slane %v720, %v729
    %v732 = vunpack.c.l.s4 1966171168
    %v733 = vunpack.c.0.s8 %v732
    %v734 = vlaneseq
    %v735 = vshrl.u32 %v734, 7
    %v736 = vsub.s32 %v733, %v735
    %v737 = vrot.slane %v721, %v736
    %v739 = vunpack.c.l.s4 1966171168
    %v740 = vunpack.c.0.s8 %v739
    %v741 = vlaneseq
    %v742 = vshrl.u32 %v741, 7
    %v743 = vsub.s32 %v740, %v742
    %v744 = vrot.slane %v722, %v743
    %v746 = vunpack.c.l.s4 1966171168
    %v747 = vunpack.c.0.s8 %v746
    %v748 = vlaneseq
    %v749 = vshrl.u32 %v748, 7
    %v750 = vsub.s32 %v747, %v749
    %v751 = vrot.slane %v723, %v750
    %v752 = vcombine.low %v730, %v737
    %v753 = vcombine.low %v744, %v751
    %v755 = vunpack.c.l.s4 1966171168
    %v756 = vunpack.c.0.s8 %v755
    %v757 = vlaneseq
    %v758 = vshrl.u32 %v757, 7
    %v759 = vsub.s32 %v756, %v758
    %v760 = vrot.slane %v752, %v759
    %v762 = vunpack.c.l.s4 1966171168
    %v763 = vunpack.c.0.s8 %v762
    %v764 = vlaneseq
    %v765 = vshrl.u32 %v764, 7
    %v766 = vsub.s32 %v763, %v765
    %v767 = vrot.slane %v753, %v766
    %v768 = vcombine.low %v760, %v767
    %v769 = vcombine.low %v149, %v150
    %v770 = vcombine.low %v151, %v152
    %v771 = vcombine.low %v153, %v154
    %v772 = vcombine.low %v155, %v156
    %v774 = vunpack.c.l.s4 1966171168
    %v775 = vunpack.c.0.s8 %v774
    %v776 = vlaneseq
    %v777 = vshrl.u32 %v776, 7
    %v778 = vsub.s32 %v775, %v777
    %v779 = vrot.slane %v769, %v778
    %v781 = vunpack.c.l.s4 1966171168
    %v782 = vunpack.c.0.s8 %v781
    %v783 = vlaneseq
    %v784 = vshrl.u32 %v783, 7
    %v785 = vsub.s32 %v782, %v784
    %v786 = vrot.slane %v770, %v785
    %v788 = vunpack.c.l.s4 1966171168
    %v789 = vunpack.c.0.s8 %v788
    %v790 = vlaneseq
    %v791 = vshrl.u32 %v790, 7
    %v792 = vsub.s32 %v789, %v791
    %v793 = vrot.slane %v771, %v792
    %v795 = vunpack.c.l.s4 1966171168
    %v796 = vunpack.c.0.s8 %v795
    %v797 = vlaneseq
    %v798 = vshrl.u32 %v797, 7
    %v799 = vsub.s32 %v796, %v798
    %v800 = vrot.slane %v772, %v799
    %v801 = vcombine.low %v779, %v786
    %v802 = vcombine.low %v793, %v800
    %v804 = vunpack.c.l.s4 1966171168
    %v805 = vunpack.c.0.s8 %v804
    %v806 = vlaneseq
    %v807 = vshrl.u32 %v806, 7
    %v808 = vsub.s32 %v805, %v807
    %v809 = vrot.slane %v801, %v808
    %v811 = vunpack.c.l.s4 1966171168
    %v812 = vunpack.c.0.s8 %v811
    %v813 = vlaneseq
    %v814 = vshrl.u32 %v813, 7
    %v815 = vsub.s32 %v812, %v814
    %v816 = vrot.slane %v802, %v815
    %v817 = vcombine.low %v809, %v816
    %v818 = vcombine.low %v157, %v158
    %v819 = vcombine.low %v159, %v160
    %v820 = vcombine.low %v161, %v162
    %v821 = vcombine.low %v163, %v164
    %v823 = vunpack.c.l.s4 1966171168
    %v824 = vunpack.c.0.s8 %v823
    %v825 = vlaneseq
    %v826 = vshrl.u32 %v825, 7
    %v827 = vsub.s32 %v824, %v826
    %v828 = vrot.slane %v818, %v827
    %v830 = vunpack.c.l.s4 1966171168
    %v831 = vunpack.c.0.s8 %v830
    %v832 = vlaneseq
    %v833 = vshrl.u32 %v832, 7
    %v834 = vsub.s32 %v831, %v833
    %v835 = vrot.slane %v819, %v834
    %v837 = vunpack.c.l.s4 1966171168
    %v838 = vunpack.c.0.s8 %v837
    %v839 = vlaneseq
    %v840 = vshrl.u32 %v839, 7
    %v841 = vsub.s32 %v838, %v840
    %v842 = vrot.slane %v820, %v841
    %v844 = vunpack.c.l.s4 1966171168
    %v845 = vunpack.c.0.s8 %v844
    %v846 = vlaneseq
    %v847 = vshrl.u32 %v846, 7
    %v848 = vsub.s32 %v845, %v847
    %v849 = vrot.slane %v821, %v848
    %v850 = vcombine.low %v828, %v835
    %v851 = vcombine.low %v842, %v849
    %v853 = vunpack.c.l.s4 1966171168
    %v854 = vunpack.c.0.s8 %v853
    %v855 = vlaneseq
    %v856 = vshrl.u32 %v855, 7
    %v857 = vsub.s32 %v854, %v856
    %v858 = vrot.slane %v850, %v857
    %v860 = vunpack.c.l.s4 1966171168
    %v861 = vunpack.c.0.s8 %v860
    %v862 = vlaneseq
    %v863 = vshrl.u32 %v862, 7
    %v864 = vsub.s32 %v861, %v863
    %v865 = vrot.slane %v851, %v864
    %v866 = vcombine.low %v858, %v865
    %v867 = vcombine.low %v165, %v166
    %v868 = vcombine.low %v167, %v168
    %v869 = vcombine.low %v169, %v170
    %v870 = vcombine.low %v171, %v172
    %v872 = vunpack.c.l.s4 1966171168
    %v873 = vunpack.c.0.s8 %v872
    %v874 = vlaneseq
    %v875 = vshrl.u32 %v874, 7
    %v876 = vsub.s32 %v873, %v875
    %v877 = vrot.slane %v867, %v876
    %v879 = vunpack.c.l.s4 1966171168
    %v880 = vunpack.c.0.s8 %v879
    %v881 = vlaneseq
    %v882 = vshrl.u32 %v881, 7
    %v883 = vsub.s32 %v880, %v882
    %v884 = vrot.slane %v868, %v883
    %v886 = vunpack.c.l.s4 1966171168
    %v887 = vunpack.c.0.s8 %v886
    %v888 = vlaneseq
    %v889 = vshrl.u32 %v888, 7
    %v890 = vsub.s32 %v887, %v889
    %v891 = vrot.slane %v869, %v890
    %v893 = vunpack.c.l.s4 1966171168
    %v894 = vunpack.c.0.s8 %v893
    %v895 = vlaneseq
    %v896 = vshrl.u32 %v895, 7
    %v897 = vsub.s32 %v894, %v896
    %v898 = vrot.slane %v870, %v897
    %v899 = vcombine.low %v877, %v884
    %v900 = vcombine.low %v891, %v898
    %v902 = vunpack.c.l.s4 1966171168
    %v903 = vunpack.c.0.s8 %v902
    %v904 = vlaneseq
    %v905 = vshrl.u32 %v904, 7
    %v906 = vsub.s32 %v903, %v905
    %v907 = vrot.slane %v899, %v906
    %v909 = vunpack.c.l.s4 1966171168
    %v910 = vunpack.c.0.s8 %v909
    %v911 = vlaneseq
    %v912 = vshrl.u32 %v911, 7
    %v913 = vsub.s32 %v910, %v912
    %v914 = vrot.slane %v900, %v913
    %v915 = vcombine.low %v907, %v914
    %v916 = vcombine.low %v173, %v174
    %v917 = vcombine.low %v175, %v176
    %v918 = vcombine.low %v177, %v178
    %v919 = vcombine.low %v179, %v180
    %v921 = vunpack.c.l.s4 1966171168
    %v922 = vunpack.c.0.s8 %v921
    %v923 = vlaneseq
    %v924 = vshrl.u32 %v923, 7
    %v925 = vsub.s32 %v922, %v924
    %v926 = vrot.slane %v916, %v925
    %v928 = vunpack.c.l.s4 1966171168
    %v929 = vunpack.c.0.s8 %v928
    %v930 = vlaneseq
    %v931 = vshrl.u32 %v930, 7
    %v932 = vsub.s32 %v929, %v931
    %v933 = vrot.slane %v917, %v932
    %v935 = vunpack.c.l.s4 1966171168
    %v936 = vunpack.c.0.s8 %v935
    %v937 = vlaneseq
    %v938 = vshrl.u32 %v937, 7
    %v939 = vsub.s32 %v936, %v938
    %v940 = vrot.slane %v918, %v939
    %v942 = vunpack.c.l.s4 1966171168
    %v943 = vunpack.c.0.s8 %v942
    %v944 = vlaneseq
    %v945 = vshrl.u32 %v944, 7
    %v946 = vsub.s32 %v943, %v945
    %v947 = vrot.slane %v919, %v946
    %v948 = vcombine.low %v926, %v933
    %v949 = vcombine.low %v940, %v947
    %v951 = vunpack.c.l.s4 1966171168
    %v952 = vunpack.c.0.s8 %v951
    %v953 = vlaneseq
    %v954 = vshrl.u32 %v953, 7
    %v955 = vsub.s32 %v952, %v954
    %v956 = vrot.slane %v948, %v955
    %v958 = vunpack.c.l.s4 1966171168
    %v959 = vunpack.c.0.s8 %v958
    %v960 = vlaneseq
    %v961 = vshrl.u32 %v960, 7
    %v962 = vsub.s32 %v959, %v961
    %v963 = vrot.slane %v949, %v962
    %v964 = vcombine.low %v956, %v963
    %vm981 = vcmask 31744
    %v982 = vsel %vm981, %v229, -inf
    %983 = vmax.xlane.f32.xlu0 %v982
    %v984 = vpop.xlane.xlu0 %983
    %v985 = vsel %vm981, %v278, -inf
    %986 = vmax.xlane.f32.xlu0 %v985
    %v987 = vpop.xlane.xlu0 %986
    %v988 = vsel %vm981, %v327, -inf
    %989 = vmax.xlane.f32.xlu0 %v988
    %v990 = vpop.xlane.xlu0 %989
    %v991 = vsel %vm981, %v376, -inf
    %992 = vmax.xlane.f32.xlu0 %v991
    %v993 = vpop.xlane.xlu0 %992
    %v994 = vsel %vm981, %v425, -inf
    %995 = vmax.xlane.f32.xlu0 %v994
    %v996 = vpop.xlane.xlu0 %995
    %v997 = vsel %vm981, %v474, -inf
    %998 = vmax.xlane.f32.xlu0 %v997
    %v999 = vpop.xlane.xlu0 %998
    %v1000 = vsel %vm981, %v523, -inf
    %1001 = vmax.xlane.f32.xlu0 %v1000
    %v1002 = vpop.xlane.xlu0 %1001
    %v1003 = vsel %vm981, %v572, -inf
    %1004 = vmax.xlane.f32.xlu0 %v1003
    %v1005 = vpop.xlane.xlu0 %1004
    %v1006 = vsel %vm981, %v621, -inf
    %1007 = vmax.xlane.f32.xlu0 %v1006
    %v1008 = vpop.xlane.xlu0 %1007
    %v1009 = vsel %vm981, %v670, -inf
    %1010 = vmax.xlane.f32.xlu0 %v1009
    %v1011 = vpop.xlane.xlu0 %1010
    %v1012 = vsel %vm981, %v719, -inf
    %1013 = vmax.xlane.f32.xlu0 %v1012
    %v1014 = vpop.xlane.xlu0 %1013
    %v1015 = vsel %vm981, %v768, -inf
    %1016 = vmax.xlane.f32.xlu0 %v1015
    %v1017 = vpop.xlane.xlu0 %1016
    %v1018 = vsel %vm981, %v817, -inf
    %1019 = vmax.xlane.f32.xlu0 %v1018
    %v1020 = vpop.xlane.xlu0 %1019
    %v1021 = vsel %vm981, %v866, -inf
    %1022 = vmax.xlane.f32.xlu0 %v1021
    %v1023 = vpop.xlane.xlu0 %1022
    %v1024 = vsel %vm981, %v915, -inf
    %1025 = vmax.xlane.f32.xlu0 %v1024
    %v1026 = vpop.xlane.xlu0 %1025
    %v1027 = vsel %vm981, %v964, -inf
    %1028 = vmax.xlane.f32.xlu0 %v1027
    %v1029 = vpop.xlane.xlu0 %1028
    %v1046 = vlaneseq
    %v1047 = vand.u32 %v1046, 127
    %v1048 = vlaneseq
    %v1049 = vshrl.u32 %v1048, 7
    %v1050 = vsub.s32 %v1047, %v1049
    %v1051 = vrot.slane %v984, %v1050
    %v1052 = vadd.s32 %v1047, 4294967288
    %v1053 = vlaneseq
    %v1054 = vshrl.u32 %v1053, 7
    %v1055 = vsub.s32 %v1052, %v1054
    %v1056 = vrot.slane %v987, %v1055
    %vm1057 = vcmask 130112
    %v1058 = vsel %vm1057, %v1056, %v1051
    %v1059 = vadd.s32 %v1047, 4294967280
    %v1060 = vlaneseq
    %v1061 = vshrl.u32 %v1060, 7
    %v1062 = vsub.s32 %v1059, %v1061
    %v1063 = vrot.slane %v990, %v1062
    %vm1064 = vcmask 195712
    %v1065 = vsel %vm1064, %v1063, %v1058
    %v1066 = vadd.s32 %v1047, 4294967272
    %v1067 = vlaneseq
    %v1068 = vshrl.u32 %v1067, 7
    %v1069 = vsub.s32 %v1066, %v1068
    %v1070 = vrot.slane %v993, %v1069
    %vm1071 = vcmask 261312
    %v1072 = vsel %vm1071, %v1070, %v1065
    %v1073 = vadd.s32 %v1047, 4294967264
    %v1074 = vlaneseq
    %v1075 = vshrl.u32 %v1074, 7
    %v1076 = vsub.s32 %v1073, %v1075
    %v1077 = vrot.slane %v996, %v1076
    %vm1078 = vcmask 326912
    %v1079 = vsel %vm1078, %v1077, %v1072
    %v1080 = vadd.s32 %v1047, 4294967256
    %v1081 = vlaneseq
    %v1082 = vshrl.u32 %v1081, 7
    %v1083 = vsub.s32 %v1080, %v1082
    %v1084 = vrot.slane %v999, %v1083
    %vm1085 = vcmask 392512
    %v1086 = vsel %vm1085, %v1084, %v1079
    %v1087 = vadd.s32 %v1047, 4294967248
    %v1088 = vlaneseq
    %v1089 = vshrl.u32 %v1088, 7
    %v1090 = vsub.s32 %v1087, %v1089
    %v1091 = vrot.slane %v1002, %v1090
    %vm1092 = vcmask 458112
    %v1093 = vsel %vm1092, %v1091, %v1086
    %v1094 = vadd.s32 %v1047, 4294967240
    %v1095 = vlaneseq
    %v1096 = vshrl.u32 %v1095, 7
    %v1097 = vsub.s32 %v1094, %v1096
    %v1098 = vrot.slane %v1005, %v1097
    %vm1099 = vcmask 523712
    %v1100 = vsel %vm1099, %v1098, %v1093
    %v1101 = vadd.s32 %v1047, 4294967232
    %v1102 = vlaneseq
    %v1103 = vshrl.u32 %v1102, 7
    %v1104 = vsub.s32 %v1101, %v1103
    %v1105 = vrot.slane %v1008, %v1104
    %vm1106 = vcmask 589312
    %v1107 = vsel %vm1106, %v1105, %v1100
    %v1108 = vadd.s32 %v1047, 4294967224
    %v1109 = vlaneseq
    %v1110 = vshrl.u32 %v1109, 7
    %v1111 = vsub.s32 %v1108, %v1110
    %v1112 = vrot.slane %v1011, %v1111
    %vm1113 = vcmask 654912
    %v1114 = vsel %vm1113, %v1112, %v1107
    %v1115 = vadd.s32 %v1047, 4294967216
    %v1116 = vlaneseq
    %v1117 = vshrl.u32 %v1116, 7
    %v1118 = vsub.s32 %v1115, %v1117
    %v1119 = vrot.slane %v1014, %v1118
    %vm1120 = vcmask 720512
    %v1121 = vsel %vm1120, %v1119, %v1114
    %v1122 = vadd.s32 %v1047, 4294967208
    %v1123 = vlaneseq
    %v1124 = vshrl.u32 %v1123, 7
    %v1125 = vsub.s32 %v1122, %v1124
    %v1126 = vrot.slane %v1017, %v1125
    %vm1127 = vcmask 786112
    %v1128 = vsel %vm1127, %v1126, %v1121
    %v1129 = vadd.s32 %v1047, 4294967200
    %v1130 = vlaneseq
    %v1131 = vshrl.u32 %v1130, 7
    %v1132 = vsub.s32 %v1129, %v1131
    %v1133 = vrot.slane %v1020, %v1132
    %vm1134 = vcmask 851712
    %v1135 = vsel %vm1134, %v1133, %v1128
    %v1136 = vadd.s32 %v1047, 4294967192
    %v1137 = vlaneseq
    %v1138 = vshrl.u32 %v1137, 7
    %v1139 = vsub.s32 %v1136, %v1138
    %v1140 = vrot.slane %v1023, %v1139
    %vm1141 = vcmask 917312
    %v1142 = vsel %vm1141, %v1140, %v1135
    %v1143 = vadd.s32 %v1047, 4294967184
    %v1144 = vlaneseq
    %v1145 = vshrl.u32 %v1144, 7
    %v1146 = vsub.s32 %v1143, %v1145
    %v1147 = vrot.slane %v1026, %v1146
    %vm1148 = vcmask 982912
    %v1149 = vsel %vm1148, %v1147, %v1142
    %v1150 = vadd.s32 %v1047, 4294967176
    %v1151 = vlaneseq
    %v1152 = vshrl.u32 %v1151, 7
    %v1153 = vsub.s32 %v1150, %v1152
    %v1154 = vrot.slane %v1029, %v1153
    %vm1155 = vcmask 1048512
    %v1156 = vsel %vm1155, %v1154, %v1149
    %1158 = vst [vmem:[#allocation5] sm:$0x1] %v1156
    // Predicated region
    $region10: #{tpu_custom_call.1} parent=1 // pred_check
      _
    $region11: #{tpu_custom_call.1} parent=1 // pred_check_branch
      %1160 = sbr.rel (0) target = $region13
    $region12: #{tpu_custom_call.1} parent=1 // pred_region
      %s1162 = ssub.s32 16, 16
      %1163 = vsyncadd [#allocation4], %s1162
      %s1165 = sshll.u32 [#allocation5], 4
      %s1166 = int_to_ptr.vmem [resolvable:$true] %s1165
      %1168 = dma.vmem_to_hbm [thread:$0]  %s1166, 16, %s1, [#allocation4]
    $region13: #{tpu_custom_call.1} parent=1 // pred_fallthru
      _
    // Predicated region
    $region14: #{tpu_custom_call.1} parent=1 // pred_check
      _
    $region15: #{tpu_custom_call.1} parent=1 // pred_check_branch
      %1170 = sbr.rel (0) target = $region17
    $region16: #{tpu_custom_call.1} parent=1 // pred_region
      %1171 = dma.done [#allocation4], 16
    $region17: #{tpu_custom_call.1} parent=1 // pred_fallthru
      _
    %1172 = vsyncpa [#allocation3], 1
    %1173 = vsyncpa [#allocation4], 1

</llo_original>
